<compile_context>
chip_gen: v6e
topology: v6e:2x2x1
jax: 0.10.0
libtpu: 0.0.40
codegen_flags: <defaults>
</compile_context>

<pallas_src>
import jax
import jax.numpy as jnp
from jax.experimental import pallas as pl
from jax.experimental.pallas import tpu as pltpu


# ---------------------------------------------------------------------------
# In-kernel math
# ---------------------------------------------------------------------------

def _softmin_rows(r):
    """Numerically-stable softmin along the last axis, f32 math, exact
    normalization (approx reciprocal was not accurate enough)."""
    neg = -r
    m = jnp.max(neg, axis=-1, keepdims=True)
    e = jnp.exp(neg - m)
    s = jnp.sum(e, axis=-1, keepdims=True)
    return e / s


def softmin_kernel(x_ref, o_ref):
    # Fast path: Wh = eye, Uh = zeros  =>  x @ Wh + h @ Uh == x.
    o_ref[...] = _softmin_rows(x_ref[...].astype(jnp.float32)).astype(o_ref.dtype)


def rnn_unit_kernel(x_ref, h_ref, wh_ref, uh_ref, o_ref, acc_ref):
    """General weights: K-tiled  x @ Wh + h @ Uh  with an f32 accumulator,
    softmin applied on the last K block."""
    k = pl.program_id(1)

    @pl.when(k == 0)
    def _():
        acc_ref[...] = jnp.zeros_like(acc_ref)

    acc_ref[...] += (
        jnp.dot(x_ref[...], wh_ref[...], preferred_element_type=jnp.float32)
        + jnp.dot(h_ref[...], uh_ref[...], preferred_element_type=jnp.float32)
    )

    @pl.when(k == pl.num_programs(1) - 1)
    def _():
        o_ref[...] = _softmin_rows(acc_ref[...]).astype(o_ref.dtype)


# ---------------------------------------------------------------------------
# Tiling / VMEM helpers
# ---------------------------------------------------------------------------

def _pick_batch_tile(b_pad, max_rows):
    """b_pad is a multiple of 8.  Keep >= 2 grid blocks whenever there is
    enough batch to split (v7x megacore); otherwise use the whole batch."""
    tb = min(b_pad, max_rows)
    if b_pad > 8 and pl.cdiv(b_pad, tb) < 2:
        tb = ((b_pad // 2 + 7) // 8) * 8
    return max(tb, 8)


def _pick_k_tile(e, max_k=256):
    """Largest multiple of 128 that divides E (capped), else the full E."""
    if e % 128 != 0:
        return e  # full-extent K block; always legal
    tk = min(e, max_k)
    while e % tk != 0:
        tk -= 128
    return tk


def _vmem_limit_bytes(block_bytes):
    """Override the scoped-VMEM limit only when the tiles actually need it."""
    need = int(block_bytes * 1.5)  # headroom for compiler-internal scratch
    if need <= 16 * 1024 * 1024:   # fits under the smallest default (v5e)
        return None
    return min(need, 64 * 1024 * 1024)  # never ask for more than v7x physical


# ---------------------------------------------------------------------------
# Wrapper
# ---------------------------------------------------------------------------

def rnn_unit_forward(x, h, Wh=None, Uh=None):
    """RNNUnit.forward.  Wh=Uh=None selects the default module config
    (requires_grad=False => Wh=eye, Uh=zeros), which reduces to softmin(x).
    NB: when Wh/Uh are None, h is (correctly) ignored — pass the weights
    explicitly if the module was ever trained."""
    B, E = x.shape
    assert h.shape == (B, E), "h must match x"
    h = h.astype(x.dtype)
    out_dtype = x.dtype
    itemsize = jnp.dtype(x.dtype).itemsize

    # Pad batch up to a sublane multiple so we can always tile.
    B_pad = ((B + 7) // 8) * 8
    if B_pad != B:
        pad = ((0, B_pad - B), (0, 0))
        x = jnp.pad(x, pad)
        h = jnp.pad(h, pad)

    if Wh is None and Uh is None:
        # -------- Fast path: softmin(x); only x is streamed (HBM-bound) -----
        tb = _pick_batch_tile(B_pad, max_rows=1024)
        grid = (pl.cdiv(B_pad, tb),)
        blk_bytes = (2 * 2 * tb * E + 2 * tb * E) * 4  # in/out dbl-buf + temps
        cparams = pltpu.CompilerParams(
            dimension_semantics=("parallel",),
            vmem_limit_bytes=_vmem_limit_bytes(blk_bytes),
        )
        cost = pl.CostEstimate(
            flops=4 * B_pad * E,
            transcendentals=B_pad * E,
            bytes_accessed=2 * B_pad * E * itemsize,
        )
        out = pl.pallas_call(
            softmin_kernel,
            out_shape=jax.ShapeDtypeStruct((B_pad, E), out_dtype),
            grid_spec=pltpu.PrefetchScalarGridSpec(
                num_scalar_prefetch=0,
                grid=grid,
                in_specs=[pl.BlockSpec((tb, E), lambda i: (i, 0))],
                out_specs=pl.BlockSpec((tb, E), lambda i: (i, 0)),
            ),
            compiler_params=cparams,
            cost_estimate=cost,
        )(x)
        return out[:B] if B_pad != B else out

    # -------- General path: K-tiled  x @ Wh + h @ Uh  then softmin ----------
    assert Wh.shape == (E, E) and Uh.shape == (E, E)
    tb = _pick_batch_tile(B_pad, max_rows=512)
    tk = _pick_k_tile(E)
    nb, nk = pl.cdiv(B_pad, tb), pl.cdiv(E, tk)
    grid = (nb, nk)

    blk_bytes = (2 * (2 * tb * tk + 2 * tk * E + tb * E) + 3 * tb * E) * 4
    cparams = pltpu.CompilerParams(
        dimension_semantics=("parallel", "arbitrary"),
        vmem_limit_bytes=_vmem_limit_bytes(blk_bytes),
    )
    cost = pl.CostEstimate(
        flops=4 * B_pad * E * E + 4 * B_pad * E,
        transcendentals=B_pad * E,
        bytes_accessed=(3 * B_pad * E + 2 * nb * E * E) * itemsize,
    )

    out = pl.pallas_call(
        rnn_unit_kernel,
        out_shape=jax.ShapeDtypeStruct((B_pad, E), out_dtype),
        grid_spec=pltpu.PrefetchScalarGridSpec(
            num_scalar_prefetch=0,
            grid=grid,
            in_specs=[
                pl.BlockSpec((tb, tk), lambda i, k: (i, k)),  # x
                pl.BlockSpec((tb, tk), lambda i, k: (i, k)),  # h
                pl.BlockSpec((tk, E), lambda i, k: (k, 0)),   # Wh (streamed over K)
                pl.BlockSpec((tk, E), lambda i, k: (k, 0)),   # Uh (streamed over K)
            ],
            out_specs=pl.BlockSpec((tb, E), lambda i, k: (i, 0)),
            scratch_shapes=[pltpu.VMEM((tb, E), jnp.float32)],
        ),
        compiler_params=cparams,
        cost_estimate=cost,
    )(x, h, Wh, Uh)
    return out[:B] if B_pad != B else out


# ---------------------------------------------------------------------------
# Demo / self-test
# ---------------------------------------------------------------------------

if __name__ == "__main__":
    # Config().num_states stand-in: lane-dense E (multiple of 128) and a batch
    # that exercises both batch tiling (2 blocks) and K tiling (2 K blocks).
    emb_dim = 512
    batch = 32

    key = jax.random.PRNGKey(0)
    kx, kh, kw, ku = jax.random.split(key, 4)
    x = jax.random.normal(kx, (batch, emb_dim), dtype=jnp.float32)
    h = jax.random.normal(kh, (batch, emb_dim), dtype=jnp.float32)

    # --- Path 1: default module config (requires_grad=False): Wh=eye, Uh=0 ---
    out_fast = jax.block_until_ready(rnn_unit_forward(x, h))
    ref_fast = jax.nn.softmax(-x, axis=-1)      # x @ eye + h @ 0 == x exactly
    assert jnp.allclose(out_fast, ref_fast, atol=1e-5, rtol=1e-5), \
        "fast-path mismatch vs reference"
    assert jnp.allclose(jnp.sum(out_fast, axis=-1), 1.0, atol=1e-4)

    # --- Path 2: general weights (K-tiled two-matmul accumulate kernel) -----
    Wh = 0.1 * jax.random.normal(kw, (emb_dim, emb_dim), dtype=jnp.float32)
    Uh = 0.1 * jax.random.normal(ku, (emb_dim, emb_dim), dtype=jnp.float32)
    out_gen = jax.block_until_ready(rnn_unit_forward(x, h, Wh, Uh))
    ref_logits = (jnp.dot(x, Wh, precision="highest")
                  + jnp.dot(h, Uh, precision="highest"))
    ref_gen = jax.nn.softmax(-ref_logits, axis=-1)
    assert jnp.allclose(out_gen, ref_gen, atol=2e-5, rtol=1e-4), \
        "general-path mismatch vs reference"
    assert jnp.allclose(jnp.sum(out_gen, axis=-1), 1.0, atol=1e-4)

    print("KERNEL_OK")
</pallas_src>

<mosaic_0001>
module attributes {stable_mosaic.version = 11 : i64} {
  func.func @softmin_kernel(%arg0: i32, %arg1: memref<16x512xf32, #tpu.memory_space<vmem>>, %arg2: memref<16x512xf32, #tpu.memory_space<vmem>>) attributes {dimension_semantics = [#tpu.dimension_semantics<parallel>], iteration_bounds = array<i64: 2>, scalar_prefetch = 0 : i64, scratch_operands = 0 : i64, tpu.core_type = #tpu.core_type<tc>, window_params = [{transform_indices = @transform_0, window_bounds = array<i64: 16, 512>}, {transform_indices = @transform_1, window_bounds = array<i64: 16, 512>}]} {
    %c0 = arith.constant 0 : index
    %c0_0 = arith.constant 0 : index
    %0 = vector.load %arg1[%c0, %c0_0] : memref<16x512xf32, #tpu.memory_space<vmem>>, vector<16x512xf32>
    %cst = arith.constant 0.000000e+00 : f32
    %1 = vector.broadcast %cst : f32 to vector<16x512xf32>
    %2 = arith.subf %1, %0 : vector<16x512xf32>
    %cst_1 = arith.constant dense<0xFF800000> : vector<16xf32>
    %3 = vector.multi_reduction <maximumf>, %2, %cst_1 [1] : vector<16x512xf32> to vector<16xf32>
    %4 = vector.shape_cast %3 : vector<16xf32> to vector<16x1xf32>
    %5 = vector.broadcast %4 : vector<16x1xf32> to vector<16x512xf32>
    %6 = arith.subf %2, %5 : vector<16x512xf32>
    %7 = math.exp %6 : vector<16x512xf32>
    %cst_2 = arith.constant dense<0.000000e+00> : vector<16xf32>
    %8 = vector.multi_reduction <add>, %7, %cst_2 [1] : vector<16x512xf32> to vector<16xf32>
    %9 = vector.shape_cast %8 : vector<16xf32> to vector<16x1xf32>
    %10 = vector.broadcast %9 : vector<16x1xf32> to vector<16x512xf32>
    %11 = arith.divf %7, %10 : vector<16x512xf32>
    %c0_3 = arith.constant 0 : index
    %c0_4 = arith.constant 0 : index
    %12 = vector.load %arg2[%c0_3, %c0_4] : memref<16x512xf32, #tpu.memory_space<vmem>>, vector<16x512xf32>
    tpu.vector_store %arg2[%c0_3, %c0_4], %11 {strides = array<i32>} : memref<16x512xf32, #tpu.memory_space<vmem>>, vector<16x512xf32>,
    return
  }
  func.func @transform_0(%arg0: i32) -> (i32, i32) {
    %c0_i32 = arith.constant 0 : i32
    %c0_i32_0 = arith.constant 0 : i32
    return %arg0, %c0_i32 : i32, i32
  }
  func.func @transform_1(%arg0: i32) -> (i32, i32) {
    %c0_i32 = arith.constant 0 : i32
    %c0_i32_0 = arith.constant 0 : i32
    return %arg0, %c0_i32 : i32, i32
  }
}

</mosaic_0001>

<llo_original>
// kernel: tpu_custom_call.1
$region0: #{tpu_custom_call.1}
  #allocation0 [shape = 'u32[]', space=smem, size = 0x4, offset = 0x4, fixed_abs, tag = 'smem constant byte address 0x4 - core index']
  #allocation1 [shape = 'u32[144,128]{1,0:T(1,128)}', space=vmem, size = 0x12000, scoped, tag = 'internal scratch']
  %s0 = inlined_call_operand.hbm [shape: f32[32,512], index: 0, kind: input, shape index: {}]
  %s1 = inlined_call_operand.hbm [shape: f32[32,512], index: 1, kind: output, shape index: {}]
  %s2 = sld [smem:[#allocation0]]
  $region41: #{tpu_custom_call.1} parent=0
    _
  %s4 = ssub.s32 1, %s2
  %s5 = scalar_select 0, %s4, %s2
  $region1: #{tpu_custom_call.1} parent=0
    #allocation2 [shape = 'u8[65536]{0}', space=vmem, size = 0x10000, scoped, tag = 'input window, operand 0']
    #allocation3 [shape = 's32[2]{0}', space=sflag, size = 0x8, scoped, tag = 'scoped memory for tpu_custom_call.1']
    #allocation4 [shape = 's32[2]{0}', space=sflag, size = 0x8, scoped, tag = 'scoped memory for tpu_custom_call.1']
    #allocation5 [shape = 'u8[65536]{0}', space=vmem, size = 0x10000, scoped, tag = 'output window, operand 0']
    %6 = vsyncpa [#allocation3], 0
    %s7 = scalar_lea.sflag [#allocation3], 1
    %8 = vsyncpa %s7, 0
    %9 = vsyncpa [#allocation4], 0
    %s10 = scalar_lea.sflag [#allocation4], 1
    %11 = vsyncpa %s10, 0
    loop: start=0, step=1, limit=4
    $region2: #{tpu_custom_call.1} parent=1 // loop_pre_header
      _
    $region3: #{tpu_custom_call.1} parent=1 // loop_header
      %s13 = sphi 0, %s17
      %p14 = scmp.ge.s32.totalorder %s13, 4
      %s23 = sphi 0, %s25
      %s26 = sphi 0, %s23
      %s27 = sphi 0, %s26
      %s43 = sphi 0, %s27
      %s49 = sphi 0, %s51
      %s52 = sphi 0, %s49
      %s53 = sphi 0, %s52
      %s69 = sphi 0, %s53
    $region4: #{tpu_custom_call.1} parent=1 // loop_header_branch
      %16 = sbr.rel (%p14) target = $region8
    $region5: #{tpu_custom_call.1} parent=1 // loop_body
      %s18 = ssub.s32 %s13, 1
      %s19 = ssub.s32 %s13, 2
      %s20 = sadd.s32 %s13, 1
      %s21 = ssub.s32 %s13, %s20
      %p22 = scmp.eq.s32.totalorder %s21, 0
      %s24 = sadd.s32 %s23, 1
      %s25 = scalar_select %p22, %s23, %s24
      %p28 = pneg %p22
      %p29 = scmp.eq.s32.totalorder %s13, 1
      %p30 = por %p28, %p29
      %p31 = scmp.ne.s32.totalorder %s23, %s26
      %p32 = scmp.eq.s32.totalorder %s13, 0
      %p33 = por %p31, %p32
      %p34 = scmp.ne.s32.totalorder %s23, %s26
      %p35 = scmp.eq.s32.totalorder %s18, 1
      %p36 = por %p34, %p35
      %p37 = scmp.ne.s32.totalorder %s26, %s27
      %p38 = scmp.eq.s32.totalorder %s18, 0
      %p39 = por %p37, %p38
      %p40 = scmp.ne.s32.totalorder %s26, %s27
      %p41 = scmp.eq.s32.totalorder %s19, 1
      %p42 = por %p40, %p41
      %p44 = scmp.ne.s32.totalorder %s27, %s43
      %p45 = scmp.eq.s32.totalorder %s19, 0
      %p46 = por %p44, %p45
      %s47 = ssub.s32 %s13, %s20
      %p48 = scmp.eq.s32.totalorder %s47, 0
      %s50 = sadd.s32 %s49, 1
      %s51 = scalar_select %p48, %s49, %s50
      %p54 = pneg %p48
      %p55 = scmp.eq.s32.totalorder %s13, 1
      %p56 = por %p54, %p55
      %p57 = scmp.ne.s32.totalorder %s49, %s52
      %p58 = scmp.eq.s32.totalorder %s13, 0
      %p59 = por %p57, %p58
      %p60 = scmp.ne.s32.totalorder %s49, %s52
      %p61 = scmp.eq.s32.totalorder %s18, 1
      %p62 = por %p60, %p61
      %p63 = scmp.ne.s32.totalorder %s52, %s53
      %p64 = scmp.eq.s32.totalorder %s18, 0
      %p65 = por %p63, %p64
      %p66 = scmp.ne.s32.totalorder %s52, %s53
      %p67 = scmp.eq.s32.totalorder %s19, 1
      %p68 = por %p66, %p67
      %p70 = scmp.ne.s32.totalorder %s53, %s69
      %p71 = scmp.eq.s32.totalorder %s19, 0
      %p72 = por %p70, %p71
      %p73 = scmp.le.s32.totalorder 1, %s13
      %p74 = scmp.lt.s32.totalorder %s13, 3
      %p75 = pnand %p73, %p74
      %p76 = pneg %p75
      // Predicated region
      $region9: #{tpu_custom_call.1} parent=5 // pred_check
        _
      $region10: #{tpu_custom_call.1} parent=5 // pred_check_branch
        %78 = sbr.rel (%p75) target = $region12
      $region11: #{tpu_custom_call.1} parent=5 // pred_region
        %s79 = ssub.s32 %s13, 1
      $region12: #{tpu_custom_call.1} parent=5 // pred_fallthru
        _
      %p80 = scmp.lt.s32.totalorder %s13, 2
      // Predicated region
      $region13: #{tpu_custom_call.1} parent=5 // pred_check
        %p81 = pneg %p80
      $region14: #{tpu_custom_call.1} parent=5 // pred_check_branch
        %83 = sbr.rel (%p81) target = $region16
      $region15: #{tpu_custom_call.1} parent=5 // pred_region
        // Predicated region
        $region17: #{tpu_custom_call.1} parent=15 // pred_check
          %p84 = pneg %p33
        $region18: #{tpu_custom_call.1} parent=15 // pred_check_branch
          %86 = sbr.rel (%p84) target = $region20
        $region19: #{tpu_custom_call.1} parent=15 // pred_region
          %s87 = sand.u32 %s23, 1
          %s88 = scalar_lea.sflag [#allocation3], %s87
          %s89 = sand.u32 %s23, 1
          %s90 = smul.addr %s89, 64
          %s91 = scalar_lea.vmem [#allocation2], %s90
          %s92 = smul.u32 2, %s13
          %s94 = ssub.s32 1024, 1024
          %95 = vsyncadd %s88, %s94
          %s96 = smul.addr %s92, 4
          %s97 = smul.addr %s96, 128
          %s98 = scalar_lea.hbm %s0, %s97
          %s99 = sshll.u32 %s91, 4
          %s100 = int_to_ptr.vmem [resolvable:$true] %s99
          %105 = dma.hbm_to_vmem [thread:$0]  %s98, 1024, %s100, %s88, 512, 512, 32
        $region20: #{tpu_custom_call.1} parent=15 // pred_fallthru
          _
      $region16: #{tpu_custom_call.1} parent=5 // pred_fallthru
        _
      %p106 = scmp.le.s32.totalorder 1, %s13
      %p107 = scmp.lt.s32.totalorder %s13, 3
      %p108 = pnand %p106, %p107
      %p109 = pneg %p108
      // Predicated region
      $region21: #{tpu_custom_call.1} parent=5 // pred_check
        _
      $region22: #{tpu_custom_call.1} parent=5 // pred_check_branch
        %111 = sbr.rel (%p108) target = $region24
      $region23: #{tpu_custom_call.1} parent=5 // pred_region
        %s112 = ssub.s32 %s13, 1
        %s113 = sand.u32 %s26, 1
        %s114 = scalar_lea.sflag [#allocation3], %s113
        %s115 = sand.u32 %s26, 1
        %s116 = smul.addr %s115, 64
        %s117 = scalar_lea.vmem [#allocation2], %s116
        // Predicated region
        $region25: #{tpu_custom_call.1} parent=23 // pred_check
          %p118 = pneg %p39
        $region26: #{tpu_custom_call.1} parent=23 // pred_check_branch
          %120 = sbr.rel (%p118) target = $region28
        $region27: #{tpu_custom_call.1} parent=23 // pred_region
          %121 = dma.done %s114, 1024
        $region28: #{tpu_custom_call.1} parent=23 // pred_fallthru
          _
        %s122 = sand.u32 %s26, 1
        %s123 = scalar_lea.sflag [#allocation3], %s122
        %s124 = sand.u32 %s26, 1
        %s125 = smul.addr %s124, 64
        %s126 = scalar_lea.vmem [#allocation2], %s125
        %p127 = pneg %p39
        %p128 = pneg %p36
        %p129 = pneg %p65
        %p130 = pneg %p62
        %s131 = sand.u32 %s52, 1
        %s132 = scalar_lea.sflag [#allocation4], %s131
        %s133 = sand.u32 %s52, 1
        %s134 = smul.addr %s133, 64
        %s135 = scalar_lea.vmem [#allocation5], %s134
        %s136 = smul.u32 2, %s18
        %s137 = smul.u32 2, %s18
        %v138 = vld [vmem:[%s117] sm:$0xff]
        %v139 = vld [vmem:[%s117 + $0x8] sm:$0xff]
        %v140 = vld [vmem:[%s117 + $0x10] sm:$0xff]
        %v141 = vld [vmem:[%s117 + $0x18] sm:$0xff]
        %v142 = vld [vmem:[%s117 + $0x20] sm:$0xff]
        %v143 = vld [vmem:[%s117 + $0x28] sm:$0xff]
        %v144 = vld [vmem:[%s117 + $0x30] sm:$0xff]
        %v145 = vld [vmem:[%s117 + $0x38] sm:$0xff]
        %v146 = vsub.f32 0.0, %v138
        %v147 = vsub.f32 0.0, %v139
        %v148 = vsub.f32 0.0, %v140
        %v149 = vsub.f32 0.0, %v141
        %v150 = vsub.f32 0.0, %v142
        %v151 = vsub.f32 0.0, %v143
        %v152 = vsub.f32 0.0, %v144
        %v153 = vsub.f32 0.0, %v145
        %v154 = vmax.f32 %v146, %v148
        %v155 = vmax.f32 %v147, %v149
        %v156 = vmax.f32 %v154, %v155
        %157 = vmax.xlane.f32.xlu0 %v156
        %v158 = vpop.xlane.xlu0 %157
        %v159 = vmax.f32 %v150, %v152
        %v160 = vmax.f32 %v151, %v153
        %v161 = vmax.f32 %v159, %v160
        %162 = vmax.xlane.f32.xlu0 %v161
        %v163 = vpop.xlane.xlu0 %162
        %v164 = vsub.f32 %v146, %v158
        %v165 = vsub.f32 %v147, %v158
        %v166 = vsub.f32 %v148, %v158
        %v167 = vsub.f32 %v149, %v158
        %v168 = vsub.f32 %v150, %v163
        %v169 = vsub.f32 %v151, %v163
        %v170 = vsub.f32 %v152, %v163
        %v171 = vsub.f32 %v153, %v163
        %v172 = vmul.f32 %v164, 1.442695
        %v173 = vpow.pop %v172
        %v174 = vmul.f32 %v165, 1.442695
        %v175 = vpow.pop %v174
        %v176 = vmul.f32 %v166, 1.442695
        %v177 = vpow.pop %v176
        %v178 = vmul.f32 %v167, 1.442695
        %v179 = vpow.pop %v178
        %v180 = vmul.f32 %v168, 1.442695
        %v181 = vpow.pop %v180
        %v182 = vmul.f32 %v169, 1.442695
        %v183 = vpow.pop %v182
        %v184 = vmul.f32 %v170, 1.442695
        %v185 = vpow.pop %v184
        %v186 = vmul.f32 %v171, 1.442695
        %v187 = vpow.pop %v186
        %v188 = vadd.f32 %v173, %v175
        %v189 = vadd.f32 %v188, %v177
        %v190 = vadd.f32 %v189, %v179
        %191 = vadd.xlane.f32.xlu0 %v190
        %v192 = vpop.xlane.xlu0 %191
        %v193 = vadd.f32 %v181, %v183
        %v194 = vadd.f32 %v193, %v185
        %v195 = vadd.f32 %v194, %v187
        %196 = vadd.xlane.f32.xlu0 %v195
        %v197 = vpop.xlane.xlu0 %196
        %v198 = vrcp.pop %v192
        %v199 = vmul.f32 %v173, %v198
        %v200 = vmul.f32 %v175, %v198
        %v201 = vmul.f32 %v177, %v198
        %v202 = vmul.f32 %v179, %v198
        %v203 = vrcp.pop %v197
        %v204 = vmul.f32 %v181, %v203
        %v205 = vmul.f32 %v183, %v203
        %v206 = vmul.f32 %v185, %v203
        %v207 = vmul.f32 %v187, %v203
        %208 = vst [vmem:[%s135] sm:$0xff] %v199
        %209 = vst [vmem:[%s135 + $0x8] sm:$0xff] %v200
        %210 = vst [vmem:[%s135 + $0x10] sm:$0xff] %v201
        %211 = vst [vmem:[%s135 + $0x18] sm:$0xff] %v202
        %212 = vst [vmem:[%s135 + $0x20] sm:$0xff] %v204
        %213 = vst [vmem:[%s135 + $0x28] sm:$0xff] %v205
        %214 = vst [vmem:[%s135 + $0x30] sm:$0xff] %v206
        %215 = vst [vmem:[%s135 + $0x38] sm:$0xff] %v207
        %s216 = sand.u32 %s52, 1
        %s217 = scalar_lea.sflag [#allocation4], %s216
        %s218 = sand.u32 %s52, 1
        %s219 = smul.addr %s218, 64
        %s220 = scalar_lea.vmem [#allocation5], %s219
        // Predicated region
        $region29: #{tpu_custom_call.1} parent=23 // pred_check
          %p221 = pneg %p62
        $region30: #{tpu_custom_call.1} parent=23 // pred_check_branch
          %223 = sbr.rel (%p221) target = $region32
        $region31: #{tpu_custom_call.1} parent=23 // pred_region
          %s224 = smul.u32 2, %s18
          %s226 = ssub.s32 1024, 1024
          %227 = vsyncadd %s217, %s226
          %s228 = smul.addr %s224, 4
          %s229 = smul.addr %s228, 128
          %s230 = scalar_lea.hbm %s1, %s229
          %s231 = sshll.u32 %s220, 4
          %s232 = int_to_ptr.vmem [resolvable:$true] %s231
          %237 = dma.vmem_to_hbm [thread:$0]  %s232, 1024, %s230, %s217, 512, 512, 32
        $region32: #{tpu_custom_call.1} parent=23 // pred_fallthru
          _
      $region24: #{tpu_custom_call.1} parent=5 // pred_fallthru
        _
      %p238 = scmp.le.s32.totalorder 2, %s13
      // Predicated region
      $region33: #{tpu_custom_call.1} parent=5 // pred_check
        %p239 = pneg %p238
      $region34: #{tpu_custom_call.1} parent=5 // pred_check_branch
        %241 = sbr.rel (%p239) target = $region36
      $region35: #{tpu_custom_call.1} parent=5 // pred_region
        %s242 = ssub.s32 %s13, 2
        // Predicated region
        $region37: #{tpu_custom_call.1} parent=35 // pred_check
          %p243 = pneg %p68
        $region38: #{tpu_custom_call.1} parent=35 // pred_check_branch
          %245 = sbr.rel (%p243) target = $region40
        $region39: #{tpu_custom_call.1} parent=35 // pred_region
          %s246 = sand.u32 %s53, 1
          %s247 = scalar_lea.sflag [#allocation4], %s246
          %s248 = sand.u32 %s53, 1
          %s249 = smul.addr %s248, 64
          %s250 = scalar_lea.vmem [#allocation5], %s249
          %251 = dma.done %s247, 1024
        $region40: #{tpu_custom_call.1} parent=35 // pred_fallthru
          _
      $region36: #{tpu_custom_call.1} parent=5 // pred_fallthru
        _
    $region6: #{tpu_custom_call.1} parent=1 // loop_footer
      %s17 = sadd.s32 1, %s13
    $region7: #{tpu_custom_call.1} parent=1 // loop_footer_branch
      %12 = sbr.rel target = $region3
    $region8: #{tpu_custom_call.1} parent=1 // loop_exit
      _
    %252 = vsyncpa [#allocation3], 1
    %s253 = scalar_lea.sflag [#allocation3], 1
    %254 = vsyncpa %s253, 1
    %255 = vsyncpa [#allocation4], 1
    %s256 = scalar_lea.sflag [#allocation4], 1
    %257 = vsyncpa %s256, 1

</llo_original>
